<compile_context>
chip_gen: v5e
topology: v5e:2x2
jax: 0.10.0
libtpu: 0.0.40
codegen_flags: <defaults>
</compile_context>

<pallas_src>
import functools

import jax
import jax.numpy as jnp
from jax import lax
from jax.experimental import pallas as pl
from jax.experimental.pallas import tpu as pltpu


def _round_up(x: int, m: int) -> int:
    return ((x + m - 1) // m) * m


def _choose_batch_tile(B: int, block_b: int) -> int:
    """Pick the batch tile TB.

    * small batches that fit one tile -> one exact block (TB == B is legal:
      a block dim equal to the full array dim satisfies the (8,128) rule).
    * otherwise: multiple-of-16 tile (bf16 sublane pairs), capped at block_b
      (VMEM) and at ceil(B/2) so the "parallel" batch axis has >= 2 grid steps
      for v7x's two TensorCores. Never exceeds B (tail rows are masked).
    """
    if B <= 256 and B <= block_b:
        return B
    half = _round_up(pl.cdiv(B, 2), 16)
    tb = max(16, min(_round_up(block_b, 16), half))
    return min(tb, B)


def _rel_cosine_kernel(q_ref, w_ref, b_ref, qa_ref, out_ref, *, n_valid):
    """One batch tile: fused linear + cosine similarity + per-tile partial sum.

    q_ref  : (TB, H)     f32/bf16  question embedding tile (cast to bf16 here)
    w_ref  : (H,  R)     bf16      hidden2rel weight (pre-transposed, resident)
    b_ref  : (1,  R)     f32       hidden2rel bias (resident)
    qa_ref : (TB, R)     bf16/f32  concatenated path embeddings tile
    out_ref: (1, 8, 128) f32       partial sum of cos over this tile (broadcast)
    n_valid: static true batch size (rows >= n_valid are garbage -> masked)
    """
    tb = q_ref.shape[0]

    # bf16 cast on the VPU (hides under the DMA stream), MXU matmul w/ f32 acc.
    q = q_ref[...].astype(jnp.bfloat16)
    rel = jnp.dot(q, w_ref[...], preferred_element_type=jnp.float32)
    rel = rel + b_ref[...]                              # (TB, R) f32
    qa = qa_ref[...].astype(jnp.float32)                # widen bf16 stream -> f32

    # Cosine epilogue: lane reductions (XLU) + rsqrt (EUP), all f32.
    dot = jnp.sum(rel * qa, axis=-1, keepdims=True)     # (TB, 1)
    na2 = jnp.sum(rel * rel, axis=-1, keepdims=True)    # (TB, 1)
    nb2 = jnp.sum(qa * qa, axis=-1, keepdims=True)      # (TB, 1)

    eps = jnp.float32(1e-8)
    # 1 / max(||a||*||b||, eps)  ==  rsqrt(max(||a||^2 * ||b||^2, eps^2))
    # (torch clamps each norm separately; identical unless exactly one vector
    #  is near-zero.)
    inv = lax.rsqrt(jnp.maximum(na2 * nb2, eps * eps))
    cos = dot * inv                                     # (TB, 1)

    # Mask out-of-range rows of a partial tail tile (their VMEM contents are
    # garbage); jnp.where is a select, so even NaN garbage contributes 0.
    rows = pl.program_id(0) * tb + lax.broadcasted_iota(jnp.int32, (tb, 1), 0)
    cos = jnp.where(rows < n_valid, cos, jnp.float32(0.0))

    psum = jnp.sum(cos)
    out_ref[...] = jnp.broadcast_to(psum, out_ref.shape).astype(jnp.float32)


def prepare_hidden2rel_params(hidden2rel_weight, hidden2rel_bias):
    """One-time parameter prep (hoisted off the per-call hot path).

    hidden2rel_weight : (R, H) PyTorch nn.Linear layout  -> (H, R) bf16 (MXU)
    hidden2rel_bias   : (R,)                              -> (1, R) f32
    """
    w = jnp.asarray(hidden2rel_weight).T.astype(jnp.bfloat16)
    b = jnp.asarray(hidden2rel_bias).astype(jnp.float32).reshape(1, -1)
    return w, b


def relation_extractor_loss(question_embedding, w_hr, b_hr, qa_path_emb,
                            *, block_b: int = 2048):
    """qa_cosine_loss = 1 - mean(cos(hidden2rel(q), qa_path_emb)).

    question_embedding : (B, H) f32 (or bf16)   H = 768 (RoBERTa [CLS])
    w_hr               : (H, R) bf16   from prepare_hidden2rel_params
    b_hr               : (1, R) f32    from prepare_hidden2rel_params
    qa_path_emb        : (B, R) f32 or bf16 (producer emitting bf16 halves HBM)
    """
    B, H = question_embedding.shape
    H_w, R = w_hr.shape
    assert H_w == H and b_hr.shape == (1, R) and qa_path_emb.shape == (B, R)

    TB = _choose_batch_tile(B, block_b)
    G = pl.cdiv(B, TB)

    kernel = functools.partial(_rel_cosine_kernel, n_valid=B)

    bytes_accessed = int(
        question_embedding.size * question_embedding.dtype.itemsize
        + qa_path_emb.size * qa_path_emb.dtype.itemsize
        + w_hr.size * 2 + b_hr.size * 4 + G * 8 * 128 * 4)
    cost = pl.CostEstimate(flops=int(2 * B * H * R), transcendentals=0,
                           bytes_accessed=bytes_accessed)

    partials = pl.pallas_call(
        kernel,
        out_shape=jax.ShapeDtypeStruct((G, 8, 128), jnp.float32),
        grid_spec=pltpu.PrefetchScalarGridSpec(
            num_scalar_prefetch=0,
            grid=(G,),
            in_specs=[
                pl.BlockSpec((TB, H), lambda i: (i, 0)),   # question emb tile
                pl.BlockSpec((H, R), lambda i: (0, 0)),    # W: resident, fetched once
                pl.BlockSpec((1, R), lambda i: (0, 0)),    # bias: resident
                pl.BlockSpec((TB, R), lambda i: (i, 0)),   # qa_path_emb tile
            ],
            out_specs=pl.BlockSpec((1, 8, 128), lambda i: (i, 0, 0)),
        ),
        compiler_params=pltpu.CompilerParams(
            dimension_semantics=("parallel",),
            # ~24 MiB needed at TB=2048 with an f32 q stream; 48 MiB is safe
            # under v7x's 64 MiB physical VMEM and v5e/v6e's 128 MiB.
            vmem_limit_bytes=48 * 1024 * 1024),
        cost_estimate=cost,
    )(question_embedding, w_hr, b_hr, qa_path_emb)

    # Tiny finalize in XLA: masked tail rows contributed exactly 0.
    qa_cosine_loss = 1.0 - jnp.sum(partials[:, 0, 0]) / B
    # vae_loss == 0 (external Qa_VAE not modeled) => total_loss == qa_cosine_loss
    return qa_cosine_loss


if __name__ == "__main__":
    key = jax.random.PRNGKey(0)
    # Shapes consistent with the module: hidden_dim = 768 (RoBERTa),
    # relation_dim * k_hop = 100 * 2 = 200 output features; batch = 40 so a
    # small block_b exercises the multi-step grid + masked partial tail path.
    B, H = 40, 768
    relation_dim, k_hop = 100, 2
    R = relation_dim * k_hop

    k1, k2, k3, k4 = jax.random.split(key, 4)
    question_embedding = jax.random.normal(k1, (B, H), jnp.float32)
    hidden2rel_weight = 0.02 * jax.random.normal(k2, (R, H), jnp.float32)  # nn.Linear (out,in)
    hidden2rel_bias = 0.02 * jax.random.normal(k3, (R,), jnp.float32)
    qa_path_emb_f32 = jax.random.normal(k4, (B, R), jnp.float32)
    # In production the path-embedding concat emits bf16 directly (halves the
    # second HBM stream); emulate that here.
    qa_path_emb = qa_path_emb_f32.astype(jnp.bfloat16)

    # One-time parameter prep (off the per-call path).
    w_hr, b_hr = prepare_hidden2rel_params(hidden2rel_weight, hidden2rel_bias)

    loss_fn = jax.jit(functools.partial(relation_extractor_loss, block_b=16))
    loss = jax.block_until_ready(
        loss_fn(question_embedding, w_hr, b_hr, qa_path_emb))

    # Pure-JAX f32 reference (same semantics as the PyTorch forward).
    rel_ref = question_embedding @ hidden2rel_weight.T + hidden2rel_bias
    denom = jnp.maximum(
        jnp.linalg.norm(rel_ref, axis=-1) * jnp.linalg.norm(qa_path_emb_f32, axis=-1),
        1e-8)
    cos_ref = jnp.sum(rel_ref * qa_path_emb_f32, axis=-1) / denom
    loss_ref = 1.0 - jnp.mean(cos_ref)

    assert jnp.isfinite(loss), float(loss)
    assert abs(float(loss) - float(loss_ref)) < 5e-2, (float(loss), float(loss_ref))
    print("KERNEL_OK")
</pallas_src>

<mosaic_0001>
module attributes {stable_mosaic.version = 11 : i64} {
  func.func @_rel_cosine_kernel(%arg0: i32, %arg1: memref<16x768xf32, #tpu.memory_space<vmem>>, %arg2: memref<768x200xbf16, #tpu.memory_space<vmem>>, %arg3: memref<1x200xf32, #tpu.memory_space<vmem>>, %arg4: memref<16x200xbf16, #tpu.memory_space<vmem>>, %arg5: memref<1x8x128xf32, #tpu.memory_space<vmem>>) attributes {dimension_semantics = [#tpu.dimension_semantics<parallel>], iteration_bounds = array<i64: 3>, scalar_prefetch = 0 : i64, scratch_operands = 0 : i64, tpu.core_type = #tpu.core_type<tc>, window_params = [{transform_indices = @transform_0, window_bounds = array<i64: 16, 768>}, {pipeline_mode = #tpu.pipeline_mode<synchronous>, transform_indices = @transform_1, window_bounds = array<i64: 768, 200>}, {pipeline_mode = #tpu.pipeline_mode<synchronous>, transform_indices = @transform_2, window_bounds = array<i64: 1, 200>}, {transform_indices = @transform_3, window_bounds = array<i64: 16, 200>}, {transform_indices = @transform_4, window_bounds = array<i64: 1, 8, 128>}]} {
    %c0 = arith.constant 0 : index
    %c0_0 = arith.constant 0 : index
    %0 = vector.load %arg1[%c0, %c0_0] : memref<16x768xf32, #tpu.memory_space<vmem>>, vector<16x768xf32>
    %1 = arith.truncf %0 : vector<16x768xf32> to vector<16x768xbf16>
    %c0_1 = arith.constant 0 : index
    %c0_2 = arith.constant 0 : index
    %2 = vector.load %arg2[%c0_1, %c0_2] : memref<768x200xbf16, #tpu.memory_space<vmem>>, vector<768x200xbf16>
    %cst = arith.constant dense<0.000000e+00> : vector<16x200xf32>
    %3 = tpu.matmul %1, %2, %cst {dimension_numbers = #tpu.dot_dimension_numbers<[1], [0], [0], [1], [0, 0, 1, 1], [], []>} : vector<16x768xbf16>, vector<768x200xbf16>, vector<16x200xf32> -> vector<16x200xf32>
    %c0_3 = arith.constant 0 : index
    %c0_4 = arith.constant 0 : index
    %4 = vector.load %arg3[%c0_3, %c0_4] : memref<1x200xf32, #tpu.memory_space<vmem>>, vector<1x200xf32>
    %5 = vector.broadcast %4 : vector<1x200xf32> to vector<16x200xf32>
    %6 = arith.addf %3, %5 : vector<16x200xf32>
    %c0_5 = arith.constant 0 : index
    %c0_6 = arith.constant 0 : index
    %7 = vector.load %arg4[%c0_5, %c0_6] : memref<16x200xbf16, #tpu.memory_space<vmem>>, vector<16x200xbf16>
    %8 = arith.extf %7 : vector<16x200xbf16> to vector<16x200xf32>
    %9 = arith.mulf %6, %8 : vector<16x200xf32>
    %cst_7 = arith.constant dense<0.000000e+00> : vector<16xf32>
    %10 = vector.multi_reduction <add>, %9, %cst_7 [1] : vector<16x200xf32> to vector<16xf32>
    %11 = vector.shape_cast %10 : vector<16xf32> to vector<16x1xf32>
    %12 = arith.mulf %6, %6 : vector<16x200xf32>
    %cst_8 = arith.constant dense<0.000000e+00> : vector<16xf32>
    %13 = vector.multi_reduction <add>, %12, %cst_8 [1] : vector<16x200xf32> to vector<16xf32>
    %14 = vector.shape_cast %13 : vector<16xf32> to vector<16x1xf32>
    %15 = arith.mulf %8, %8 : vector<16x200xf32>
    %cst_9 = arith.constant dense<0.000000e+00> : vector<16xf32>
    %16 = vector.multi_reduction <add>, %15, %cst_9 [1] : vector<16x200xf32> to vector<16xf32>
    %17 = vector.shape_cast %16 : vector<16xf32> to vector<16x1xf32>
    %18 = arith.mulf %14, %17 : vector<16x1xf32>
    %cst_10 = arith.constant 9.99999993E-9 : f32
    %cst_11 = arith.constant 9.99999993E-9 : f32
    %19 = arith.mulf %cst_10, %cst_11 : f32
    %20 = vector.broadcast %19 : f32 to vector<16x1xf32>
    %21 = arith.maximumf %18, %20 : vector<16x1xf32>
    %22 = math.rsqrt %21 : vector<16x1xf32>
    %23 = arith.mulf %11, %22 : vector<16x1xf32>
    %c16_i32 = arith.constant 16 : i32
    %24 = arith.muli %arg0, %c16_i32 : i32
    %25 = tpu.iota {dimensions = array<i32: 0>} : vector<16x1xi32>
    %26 = vector.broadcast %24 : i32 to vector<16x1xi32>
    %27 = arith.addi %26, %25 : vector<16x1xi32>
    %c40_i32 = arith.constant 40 : i32
    %28 = vector.broadcast %c40_i32 : i32 to vector<16x1xi32>
    %29 = arith.cmpi slt, %27, %28 : vector<16x1xi32>
    %cst_12 = arith.constant 0.000000e+00 : f32
    %30 = vector.broadcast %cst_12 : f32 to vector<16x1xf32>
    %31 = arith.select %29, %23, %30 : vector<16x1xi1>, vector<16x1xf32>
    %32 = vector.shape_cast %31 : vector<16x1xf32> to vector<1x16x1xf32>
    %cst_13 = arith.constant dense<0.000000e+00> : vector<1xf32>
    %33 = vector.multi_reduction <add>, %32, %cst_13 [1, 2] : vector<1x16x1xf32> to vector<1xf32>
    %34 = vector.shape_cast %33 : vector<1xf32> to vector<1x1x1xf32>
    %35 = vector.extract %34[0, 0, 0] : f32 from vector<1x1x1xf32>
    %36 = vector.broadcast %35 : f32 to vector<1x8x128xf32>
    %c0_14 = arith.constant 0 : index
    %c0_15 = arith.constant 0 : index
    %c0_16 = arith.constant 0 : index
    %37 = vector.load %arg5[%c0_14, %c0_15, %c0_16] : memref<1x8x128xf32, #tpu.memory_space<vmem>>, vector<1x8x128xf32>
    tpu.vector_store %arg5[%c0_14, %c0_15, %c0_16], %36 {strides = array<i32>} : memref<1x8x128xf32, #tpu.memory_space<vmem>>, vector<1x8x128xf32>,
    return
  }
  func.func @transform_0(%arg0: i32) -> (i32, i32) {
    %c0_i32 = arith.constant 0 : i32
    %c0_i32_0 = arith.constant 0 : i32
    return %arg0, %c0_i32 : i32, i32
  }
  func.func @transform_1(%arg0: i32) -> (i32, i32) {
    %c0_i32 = arith.constant 0 : i32
    %c0_i32_0 = arith.constant 0 : i32
    %c0_i32_1 = arith.constant 0 : i32
    return %c0_i32, %c0_i32_0 : i32, i32
  }
  func.func @transform_2(%arg0: i32) -> (i32, i32) {
    %c0_i32 = arith.constant 0 : i32
    %c0_i32_0 = arith.constant 0 : i32
    %c0_i32_1 = arith.constant 0 : i32
    return %c0_i32, %c0_i32_0 : i32, i32
  }
  func.func @transform_3(%arg0: i32) -> (i32, i32) {
    %c0_i32 = arith.constant 0 : i32
    %c0_i32_0 = arith.constant 0 : i32
    return %arg0, %c0_i32 : i32, i32
  }
  func.func @transform_4(%arg0: i32) -> (i32, i32, i32) {
    %c0_i32 = arith.constant 0 : i32
    %c0_i32_0 = arith.constant 0 : i32
    %c0_i32_1 = arith.constant 0 : i32
    return %arg0, %c0_i32, %c0_i32_0 : i32, i32, i32
  }
}

</mosaic_0001>

<llo_original>
// kernel: relation_extractor_loss.1
$region0: #{relation_extractor_loss.1}
  #allocation0 [shape = 'u32[]', space=smem, size = 0x4, offset = 0x4, fixed_abs, tag = 'smem constant byte address 0x4 - core index']
  #allocation1 [shape = 'u32[72,128]{1,0:T(1,128)}', space=vmem, size = 0x9000, scoped, tag = 'internal scratch']
  %s0 = inlined_call_operand.vmem [shape: f32[40,768], index: 0, kind: input, shape index: {}]
  %s1 = inlined_call_operand.vmem [shape: bf16[768,200], index: 1, kind: input, shape index: {}]
  %s2 = inlined_call_operand.vmem [shape: f32[1,200], index: 2, kind: input, shape index: {}]
  %s3 = inlined_call_operand.vmem [shape: bf16[40,200], index: 3, kind: input, shape index: {}]
  %s4 = inlined_call_operand.vmem [shape: f32[3,8,128], index: 4, kind: output, shape index: {}]
  %s5 = sld [smem:[#allocation0]]
  $region49: #{relation_extractor_loss.1} parent=0
    _
  %s7 = ssub.s32 1, %s5
  %s8 = scalar_select 0, %s7, %s5
  loop: start=0, step=1, limit=5
  $region2: #{relation_extractor_loss.1} parent=0 // loop_pre_header
    _
  $region3: #{relation_extractor_loss.1} parent=0 // loop_header
    %s10 = sphi 0, %s14
    %p11 = scmp.ge.s32.totalorder %s10, 5
    %s20 = sphi 0, %s22
    %s23 = sphi 0, %s20
    %s24 = sphi 0, %s23
    %s40 = sphi 0, %s24
    %s44 = sphi 0, %s44
    %s46 = sphi 0, %s44
    %s47 = sphi 0, %s46
    %s61 = sphi 0, %s47
    %s65 = sphi 0, %s65
    %s67 = sphi 0, %s65
    %s68 = sphi 0, %s67
    %s82 = sphi 0, %s68
    %s88 = sphi 0, %s90
    %s91 = sphi 0, %s88
    %s92 = sphi 0, %s91
    %s108 = sphi 0, %s92
    %s114 = sphi 0, %s116
    %s117 = sphi 0, %s114
    %s118 = sphi 0, %s117
    %s134 = sphi 0, %s118
  $region4: #{relation_extractor_loss.1} parent=0 // loop_header_branch
    %13 = sbr.rel (%p11) target = $region8
  $region5: #{relation_extractor_loss.1} parent=0 // loop_body
    %s15 = ssub.s32 %s10, 1
    %s16 = ssub.s32 %s10, 2
    %s17 = sadd.s32 %s10, 1
    %s18 = ssub.s32 %s10, %s17
    %p19 = scmp.eq.s32.totalorder %s18, 0
    %s21 = sadd.s32 %s20, 1
    %s22 = scalar_select %p19, %s20, %s21
    %p25 = pneg %p19
    %p26 = scmp.eq.s32.totalorder %s10, 2
    %p27 = por %p25, %p26
    %p28 = scmp.ne.s32.totalorder %s20, %s23
    %p29 = scmp.eq.s32.totalorder %s10, 0
    %p30 = por %p28, %p29
    %p31 = scmp.ne.s32.totalorder %s20, %s23
    %p32 = scmp.eq.s32.totalorder %s15, 2
    %p33 = por %p31, %p32
    %p34 = scmp.ne.s32.totalorder %s23, %s24
    %p35 = scmp.eq.s32.totalorder %s15, 0
    %p36 = por %p34, %p35
    %p37 = scmp.ne.s32.totalorder %s23, %s24
    %p38 = scmp.eq.s32.totalorder %s16, 2
    %p39 = por %p37, %p38
    %p41 = scmp.ne.s32.totalorder %s24, %s40
    %p42 = scmp.eq.s32.totalorder %s16, 0
    %p43 = por %p41, %p42
    %s45 = sadd.s32 %s44, 1
    %p48 = scmp.eq.s32.totalorder %s10, 2
    %p49 = scmp.ne.s32.totalorder %s44, %s46
    %p50 = scmp.eq.s32.totalorder %s10, 0
    %p51 = por %p49, %p50
    %p52 = scmp.ne.s32.totalorder %s44, %s46
    %p53 = scmp.eq.s32.totalorder %s15, 2
    %p54 = por %p52, %p53
    %p55 = scmp.ne.s32.totalorder %s46, %s47
    %p56 = scmp.eq.s32.totalorder %s15, 0
    %p57 = por %p55, %p56
    %p58 = scmp.ne.s32.totalorder %s46, %s47
    %p59 = scmp.eq.s32.totalorder %s16, 2
    %p60 = por %p58, %p59
    %p62 = scmp.ne.s32.totalorder %s47, %s61
    %p63 = scmp.eq.s32.totalorder %s16, 0
    %p64 = por %p62, %p63
    %s66 = sadd.s32 %s65, 1
    %p69 = scmp.eq.s32.totalorder %s10, 2
    %p70 = scmp.ne.s32.totalorder %s65, %s67
    %p71 = scmp.eq.s32.totalorder %s10, 0
    %p72 = por %p70, %p71
    %p73 = scmp.ne.s32.totalorder %s65, %s67
    %p74 = scmp.eq.s32.totalorder %s15, 2
    %p75 = por %p73, %p74
    %p76 = scmp.ne.s32.totalorder %s67, %s68
    %p77 = scmp.eq.s32.totalorder %s15, 0
    %p78 = por %p76, %p77
    %p79 = scmp.ne.s32.totalorder %s67, %s68
    %p80 = scmp.eq.s32.totalorder %s16, 2
    %p81 = por %p79, %p80
    %p83 = scmp.ne.s32.totalorder %s68, %s82
    %p84 = scmp.eq.s32.totalorder %s16, 0
    %p85 = por %p83, %p84
    %s86 = ssub.s32 %s10, %s17
    %p87 = scmp.eq.s32.totalorder %s86, 0
    %s89 = sadd.s32 %s88, 1
    %s90 = scalar_select %p87, %s88, %s89
    %p93 = pneg %p87
    %p94 = scmp.eq.s32.totalorder %s10, 2
    %p95 = por %p93, %p94
    %p96 = scmp.ne.s32.totalorder %s88, %s91
    %p97 = scmp.eq.s32.totalorder %s10, 0
    %p98 = por %p96, %p97
    %p99 = scmp.ne.s32.totalorder %s88, %s91
    %p100 = scmp.eq.s32.totalorder %s15, 2
    %p101 = por %p99, %p100
    %p102 = scmp.ne.s32.totalorder %s91, %s92
    %p103 = scmp.eq.s32.totalorder %s15, 0
    %p104 = por %p102, %p103
    %p105 = scmp.ne.s32.totalorder %s91, %s92
    %p106 = scmp.eq.s32.totalorder %s16, 2
    %p107 = por %p105, %p106
    %p109 = scmp.ne.s32.totalorder %s92, %s108
    %p110 = scmp.eq.s32.totalorder %s16, 0
    %p111 = por %p109, %p110
    %s112 = ssub.s32 %s10, %s17
    %p113 = scmp.eq.s32.totalorder %s112, 0
    %s115 = sadd.s32 %s114, 1
    %s116 = scalar_select %p113, %s114, %s115
    %p119 = pneg %p113
    %p120 = scmp.eq.s32.totalorder %s10, 2
    %p121 = por %p119, %p120
    %p122 = scmp.ne.s32.totalorder %s114, %s117
    %p123 = scmp.eq.s32.totalorder %s10, 0
    %p124 = por %p122, %p123
    %p125 = scmp.ne.s32.totalorder %s114, %s117
    %p126 = scmp.eq.s32.totalorder %s15, 2
    %p127 = por %p125, %p126
    %p128 = scmp.ne.s32.totalorder %s117, %s118
    %p129 = scmp.eq.s32.totalorder %s15, 0
    %p130 = por %p128, %p129
    %p131 = scmp.ne.s32.totalorder %s117, %s118
    %p132 = scmp.eq.s32.totalorder %s16, 2
    %p133 = por %p131, %p132
    %p135 = scmp.ne.s32.totalorder %s118, %s134
    %p136 = scmp.eq.s32.totalorder %s16, 0
    %p137 = por %p135, %p136
    %p138 = scmp.le.s32.totalorder 1, %s10
    %p139 = scmp.lt.s32.totalorder %s10, 4
    %p140 = pnand %p138, %p139
    %p141 = pneg %p140
    // Predicated region
    $region9: #{relation_extractor_loss.1} parent=5 // pred_check
      _
    $region10: #{relation_extractor_loss.1} parent=5 // pred_check_branch
      %143 = sbr.rel (%p140) target = $region12
    $region11: #{relation_extractor_loss.1} parent=5 // pred_region
      %s144 = ssub.s32 %s10, 1
      // Predicated region
      $region13: #{relation_extractor_loss.1} parent=11 // pred_check
        %p145 = pneg %p57
      $region14: #{relation_extractor_loss.1} parent=11 // pred_check_branch
        %147 = sbr.rel (%p145) target = $region16
      $region15: #{relation_extractor_loss.1} parent=11 // pred_region
        _
      $region16: #{relation_extractor_loss.1} parent=11 // pred_fallthru
        _
      // Predicated region
      $region17: #{relation_extractor_loss.1} parent=11 // pred_check
        %p148 = pneg %p78
      $region18: #{relation_extractor_loss.1} parent=11 // pred_check_branch
        %150 = sbr.rel (%p148) target = $region20
      $region19: #{relation_extractor_loss.1} parent=11 // pred_region
        _
      $region20: #{relation_extractor_loss.1} parent=11 // pred_fallthru
        _
    $region12: #{relation_extractor_loss.1} parent=5 // pred_fallthru
      _
    %p151 = scmp.lt.s32.totalorder %s10, 3
    // Predicated region
    $region21: #{relation_extractor_loss.1} parent=5 // pred_check
      %p152 = pneg %p151
    $region22: #{relation_extractor_loss.1} parent=5 // pred_check_branch
      %154 = sbr.rel (%p152) target = $region24
    $region23: #{relation_extractor_loss.1} parent=5 // pred_region
      // Predicated region
      $region25: #{relation_extractor_loss.1} parent=23 // pred_check
        %p155 = pneg %p30
      $region26: #{relation_extractor_loss.1} parent=23 // pred_check_branch
        %157 = sbr.rel (%p155) target = $region28
      $region27: #{relation_extractor_loss.1} parent=23 // pred_region
        %s158 = smul.u32 2, %s10
        %s159 = ssub.s32 5, %s158
        %p160 = scmp.lt.s32.totalorder %s159, 2
        %s161 = scalar_select %p160, %s159, 2
        %s162 = smul.u32 8, %s161
        %s163 = smul.u32 %s162, 6
        %p164 = scmp.lt.s32.totalorder %s158, 4
        %s165 = scalar_select %p164, %s158, 4
        %s166 = smul.addr %s165, 6
        %s167 = smul.addr %s166, 8
        %s168 = scalar_lea.vmem %s0, %s167
        %s169 = smul.u32 2, %s10
        %s170 = ssub.s32 5, %s169
        %p171 = scmp.lt.s32.totalorder %s170, 2
        %s172 = scalar_select %p171, %s170, 2
        %s173 = smul.u32 8, %s172
        %s174 = smul.u32 %s173, 6
      $region28: #{relation_extractor_loss.1} parent=23 // pred_fallthru
        _
      // Predicated region
      $region29: #{relation_extractor_loss.1} parent=23 // pred_check
        %p175 = pneg %p98
      $region30: #{relation_extractor_loss.1} parent=23 // pred_check_branch
        %177 = sbr.rel (%p175) target = $region32
      $region31: #{relation_extractor_loss.1} parent=23 // pred_region
        %s178 = smul.u32 2, %s10
        %s179 = ssub.s32 5, %s178
        %p180 = scmp.lt.s32.totalorder %s179, 2
        %s181 = scalar_select %p180, %s179, 2
        %s182 = smul.u32 4, %s181
        %s183 = smul.u32 %s182, 2
        %p184 = scmp.lt.s32.totalorder %s178, 4
        %s185 = scalar_select %p184, %s178, 4
        %s186 = smul.addr %s185, 2
        %s187 = smul.addr %s186, 4
        %s188 = scalar_lea.vmem %s3, %s187
        %s189 = smul.u32 2, %s10
        %s190 = ssub.s32 5, %s189
        %p191 = scmp.lt.s32.totalorder %s190, 2
        %s192 = scalar_select %p191, %s190, 2
        %s193 = smul.u32 4, %s192
        %s194 = smul.u32 %s193, 2
      $region32: #{relation_extractor_loss.1} parent=23 // pred_fallthru
        _
    $region24: #{relation_extractor_loss.1} parent=5 // pred_fallthru
      _
    %p195 = scmp.le.s32.totalorder 1, %s10
    %p196 = scmp.lt.s32.totalorder %s10, 4
    %p197 = pnand %p195, %p196
    %p198 = pneg %p197
    // Predicated region
    $region33: #{relation_extractor_loss.1} parent=5 // pred_check
      _
    $region34: #{relation_extractor_loss.1} parent=5 // pred_check_branch
      %200 = sbr.rel (%p197) target = $region36
    $region35: #{relation_extractor_loss.1} parent=5 // pred_region
      %s201 = ssub.s32 %s10, 1
      %s202 = smul.u32 2, %s15
      %s203 = ssub.s32 5, %s202
      %p204 = scmp.lt.s32.totalorder %s203, 2
      %s205 = scalar_select %p204, %s203, 2
      %s206 = smul.u32 8, %s205
      %s207 = smul.u32 %s206, 6
      %p208 = scmp.lt.s32.totalorder %s202, 4
      %s209 = scalar_select %p208, %s202, 4
      %s210 = smul.addr %s209, 6
      %s211 = smul.addr %s210, 8
      %s212 = scalar_lea.vmem %s0, %s211
      %p213 = pneg %p36
      %p214 = pneg %p33
      %p215 = pneg %p57
      %p216 = pneg %p54
      %p217 = pneg %p78
      %p218 = pneg %p75
      %s219 = smul.u32 2, %s15
      %s220 = ssub.s32 5, %s219
      %p221 = scmp.lt.s32.totalorder %s220, 2
      %s222 = scalar_select %p221, %s220, 2
      %s223 = smul.u32 4, %s222
      %s224 = smul.u32 %s223, 2
      %p225 = scmp.lt.s32.totalorder %s219, 4
      %s226 = scalar_select %p225, %s219, 4
      %s227 = smul.addr %s226, 2
      %s228 = smul.addr %s227, 4
      %s229 = scalar_lea.vmem %s3, %s228
      %p230 = pneg %p104
      %p231 = pneg %p101
      %p232 = pneg %p130
      %p233 = pneg %p127
      %p234 = scmp.lt.s32.totalorder %s15, 2
      %s235 = scalar_select %p234, %s15, 2
      %s236 = smul.addr %s235, 8
      %s237 = scalar_lea.vmem %s4, %s236
      %s238 = smul.u32 2, %s15
      %s239 = ssub.s32 5, %s238
      %p240 = scmp.lt.s32.totalorder %s239, 2
      %s241 = scalar_select %p240, %s239, 2
      %s242 = smul.u32 8, %s241
      %s243 = smul.u32 %s242, 6
      %p244 = scmp.lt.s32.totalorder %s238, 4
      %s245 = scalar_select %p244, %s238, 4
      %s246 = smul.addr %s245, 6
      %s247 = smul.addr %s246, 8
      %s248 = scalar_lea.vmem %s0, %s247
      %s249 = smul.u32 2, %s15
      %s250 = ssub.s32 5, %s249
      %p251 = scmp.lt.s32.totalorder %s250, 2
      %s252 = scalar_select %p251, %s250, 2
      %s253 = smul.u32 8, %s252
      %s254 = smul.u32 %s253, 6
      %s255 = smul.u32 2, %s15
      %s256 = ssub.s32 5, %s255
      %p257 = scmp.lt.s32.totalorder %s256, 2
      %s258 = scalar_select %p257, %s256, 2
      %s259 = smul.u32 4, %s258
      %s260 = smul.u32 %s259, 2
      %p261 = scmp.lt.s32.totalorder %s255, 4
      %s262 = scalar_select %p261, %s255, 4
      %s263 = smul.addr %s262, 2
      %s264 = smul.addr %s263, 4
      %s265 = scalar_lea.vmem %s3, %s264
      %s266 = smul.u32 2, %s15
      %s267 = ssub.s32 5, %s266
      %p268 = scmp.lt.s32.totalorder %s267, 2
      %s269 = scalar_select %p268, %s267, 2
      %s270 = smul.u32 4, %s269
      %s271 = smul.u32 %s270, 2
      %p272 = scmp.lt.s32.totalorder %s15, 2
      %s273 = scalar_select %p272, %s15, 2
      %s274 = smul.addr %s273, 8
      %s275 = scalar_lea.vmem %s4, %s274
      %v276 = vld [vmem:[%s248] sm:$0xff]
      %v277 = vld [vmem:[%s248 + $0x8] sm:$0xff]
      %v278 = vld [vmem:[%s248 + $0x10] sm:$0xff]
      %v279 = vld [vmem:[%s248 + $0x18] sm:$0xff]
      %v280 = vld [vmem:[%s248 + $0x20] sm:$0xff]
      %v281 = vld [vmem:[%s248 + $0x28] sm:$0xff]
      %v282 = vld [vmem:[%s248 + $0x30] sm:$0xff]
      %v283 = vld [vmem:[%s248 + $0x38] sm:$0xff]
      %v284 = vld [vmem:[%s248 + $0x40] sm:$0xff]
      %v285 = vld [vmem:[%s248 + $0x48] sm:$0xff]
      %v286 = vld [vmem:[%s248 + $0x50] sm:$0xff]
      %v287 = vld [vmem:[%s248 + $0x58] sm:$0xff]
      %v288 = vpack.c.bf16 %v282, %v276
      %v289 = vpack.c.bf16 %v283, %v277
      %v290 = vpack.c.bf16 %v284, %v278
      %v291 = vpack.c.bf16 %v285, %v279
      %v292 = vpack.c.bf16 %v286, %v280
      %v293 = vpack.c.bf16 %v287, %v281
      %v294 = vld [vmem:[%s1] sm:$0xff]
      %v295 = vld [vmem:[%s1 + $0x8] sm:$0xff]
      %v296 = vld [vmem:[%s1 + $0x10] sm:$0xff]
      %v297 = vld [vmem:[%s1 + $0x18] sm:$0xff]
      %v298 = vld [vmem:[%s1 + $0x20] sm:$0xff]
      %v299 = vld [vmem:[%s1 + $0x28] sm:$0xff]
      %v300 = vld [vmem:[%s1 + $0x30] sm:$0xff]
      %v301 = vld [vmem:[%s1 + $0x38] sm:$0xff]
      %v302 = vld [vmem:[%s1 + $0x40] sm:$0xff]
      %v303 = vld [vmem:[%s1 + $0x48] sm:$0xff]
      %v304 = vld [vmem:[%s1 + $0x50] sm:$0xff]
      %v305 = vld [vmem:[%s1 + $0x58] sm:$0xff]
      %v306 = vld [vmem:[%s1 + $0x60] sm:$0xff]
      %v307 = vld [vmem:[%s1 + $0x68] sm:$0xff]
      %v308 = vld [vmem:[%s1 + $0x70] sm:$0xff]
      %v309 = vld [vmem:[%s1 + $0x78] sm:$0xff]
      %v310 = vld [vmem:[%s1 + $0x80] sm:$0xff]
      %v311 = vld [vmem:[%s1 + $0x88] sm:$0xff]
      %v312 = vld [vmem:[%s1 + $0x90] sm:$0xff]
      %v313 = vld [vmem:[%s1 + $0x98] sm:$0xff]
      %v314 = vld [vmem:[%s1 + $0xa0] sm:$0xff]
      %v315 = vld [vmem:[%s1 + $0xa8] sm:$0xff]
      %v316 = vld [vmem:[%s1 + $0xb0] sm:$0xff]
      %v317 = vld [vmem:[%s1 + $0xb8] sm:$0xff]
      %v318 = vld [vmem:[%s1 + $0xc0] sm:$0xff]
      %v319 = vld [vmem:[%s1 + $0xc8] sm:$0xff]
      %v320 = vld [vmem:[%s1 + $0xd0] sm:$0xff]
      %v321 = vld [vmem:[%s1 + $0xd8] sm:$0xff]
      %v322 = vld [vmem:[%s1 + $0xe0] sm:$0xff]
      %v323 = vld [vmem:[%s1 + $0xe8] sm:$0xff]
      %v324 = vld [vmem:[%s1 + $0xf0] sm:$0xff]
      %v325 = vld [vmem:[%s1 + $0xf8] sm:$0xff]
      %v326 = vld [vmem:[%s1 + $0x100] sm:$0xff]
      %v327 = vld [vmem:[%s1 + $0x108] sm:$0xff]
      %v328 = vld [vmem:[%s1 + $0x110] sm:$0xff]
      %v329 = vld [vmem:[%s1 + $0x118] sm:$0xff]
      %v330 = vld [vmem:[%s1 + $0x120] sm:$0xff]
      %v331 = vld [vmem:[%s1 + $0x128] sm:$0xff]
      %v332 = vld [vmem:[%s1 + $0x130] sm:$0xff]
      %v333 = vld [vmem:[%s1 + $0x138] sm:$0xff]
      %v334 = vld [vmem:[%s1 + $0x140] sm:$0xff]
      %v335 = vld [vmem:[%s1 + $0x148] sm:$0xff]
      %v336 = vld [vmem:[%s1 + $0x150] sm:$0xff]
      %v337 = vld [vmem:[%s1 + $0x158] sm:$0xff]
      %v338 = vld [vmem:[%s1 + $0x160] sm:$0xff]
      %v339 = vld [vmem:[%s1 + $0x168] sm:$0xff]
      %v340 = vld [vmem:[%s1 + $0x170] sm:$0xff]
      %v341 = vld [vmem:[%s1 + $0x178] sm:$0xff]
      %v342 = vld [vmem:[%s1 + $0x180] sm:$0xff]
      %v343 = vld [vmem:[%s1 + $0x188] sm:$0xff]
      %v344 = vld [vmem:[%s1 + $0x190] sm:$0xff]
      %v345 = vld [vmem:[%s1 + $0x198] sm:$0xff]
      %v346 = vld [vmem:[%s1 + $0x1a0] sm:$0xff]
      %v347 = vld [vmem:[%s1 + $0x1a8] sm:$0xff]
      %v348 = vld [vmem:[%s1 + $0x1b0] sm:$0xff]
      %v349 = vld [vmem:[%s1 + $0x1b8] sm:$0xff]
      %v350 = vld [vmem:[%s1 + $0x1c0] sm:$0xff]
      %v351 = vld [vmem:[%s1 + $0x1c8] sm:$0xff]
      %v352 = vld [vmem:[%s1 + $0x1d0] sm:$0xff]
      %v353 = vld [vmem:[%s1 + $0x1d8] sm:$0xff]
      %v354 = vld [vmem:[%s1 + $0x1e0] sm:$0xff]
      %v355 = vld [vmem:[%s1 + $0x1e8] sm:$0xff]
      %v356 = vld [vmem:[%s1 + $0x1f0] sm:$0xff]
      %v357 = vld [vmem:[%s1 + $0x1f8] sm:$0xff]
      %v358 = vld [vmem:[%s1 + $0x200] sm:$0xff]
      %v359 = vld [vmem:[%s1 + $0x208] sm:$0xff]
      %v360 = vld [vmem:[%s1 + $0x210] sm:$0xff]
      %v361 = vld [vmem:[%s1 + $0x218] sm:$0xff]
      %v362 = vld [vmem:[%s1 + $0x220] sm:$0xff]
      %v363 = vld [vmem:[%s1 + $0x228] sm:$0xff]
      %v364 = vld [vmem:[%s1 + $0x230] sm:$0xff]
      %v365 = vld [vmem:[%s1 + $0x238] sm:$0xff]
      %v366 = vld [vmem:[%s1 + $0x240] sm:$0xff]
      %v367 = vld [vmem:[%s1 + $0x248] sm:$0xff]
      %v368 = vld [vmem:[%s1 + $0x250] sm:$0xff]
      %v369 = vld [vmem:[%s1 + $0x258] sm:$0xff]
      %v370 = vld [vmem:[%s1 + $0x260] sm:$0xff]
      %v371 = vld [vmem:[%s1 + $0x268] sm:$0xff]
      %v372 = vld [vmem:[%s1 + $0x270] sm:$0xff]
      %v373 = vld [vmem:[%s1 + $0x278] sm:$0xff]
      %v374 = vld [vmem:[%s1 + $0x280] sm:$0xff]
      %v375 = vld [vmem:[%s1 + $0x288] sm:$0xff]
      %v376 = vld [vmem:[%s1 + $0x290] sm:$0xff]
      %v377 = vld [vmem:[%s1 + $0x298] sm:$0xff]
      %v378 = vld [vmem:[%s1 + $0x2a0] sm:$0xff]
      %v379 = vld [vmem:[%s1 + $0x2a8] sm:$0xff]
      %v380 = vld [vmem:[%s1 + $0x2b0] sm:$0xff]
      %v381 = vld [vmem:[%s1 + $0x2b8] sm:$0xff]
      %v382 = vld [vmem:[%s1 + $0x2c0] sm:$0xff]
      %v383 = vld [vmem:[%s1 + $0x2c8] sm:$0xff]
      %v384 = vld [vmem:[%s1 + $0x2d0] sm:$0xff]
      %v385 = vld [vmem:[%s1 + $0x2d8] sm:$0xff]
      %v386 = vld [vmem:[%s1 + $0x2e0] sm:$0xff]
      %v387 = vld [vmem:[%s1 + $0x2e8] sm:$0xff]
      %v388 = vld [vmem:[%s1 + $0x2f0] sm:$0xff]
      %v389 = vld [vmem:[%s1 + $0x2f8] sm:$0xff]
      %v390 = vld [vmem:[%s2] sm:$0x3]
      %v392 = vperm.slane %v390, 0
      %v393 = vperm.slane %v390, 1
      %v492 = vunpack.c.l.b16 %v294
      %v493 = vunpack.c.h.b16 %v294
      %v494 = vunpack.c.l.b16 %v295
      %v495 = vunpack.c.h.b16 %v295
      %v496 = vunpack.c.l.b16 %v296
      %v497 = vunpack.c.h.b16 %v296
      %v498 = vunpack.c.l.b16 %v297
      %v499 = vunpack.c.h.b16 %v297
      %v500 = vunpack.c.l.b16 %v298
      %v501 = vunpack.c.h.b16 %v298
      %v502 = vunpack.c.l.b16 %v299
      %v503 = vunpack.c.h.b16 %v299
      %v504 = vunpack.c.l.b16 %v300
      %v505 = vunpack.c.h.b16 %v300
      %v506 = vunpack.c.l.b16 %v301
      %v507 = vunpack.c.h.b16 %v301
      %v508 = vunpack.c.l.b16 %v302
      %v509 = vunpack.c.h.b16 %v302
      %v510 = vunpack.c.l.b16 %v303
      %v511 = vunpack.c.h.b16 %v303
      %v512 = vunpack.c.l.b16 %v304
      %v513 = vunpack.c.h.b16 %v304
      %v514 = vunpack.c.l.b16 %v305
      %v515 = vunpack.c.h.b16 %v305
      %v516 = vunpack.c.l.b16 %v306
      %v517 = vunpack.c.h.b16 %v306
      %v518 = vunpack.c.l.b16 %v307
      %v519 = vunpack.c.h.b16 %v307
      %v520 = vunpack.c.l.b16 %v308
      %v521 = vunpack.c.h.b16 %v308
      %v522 = vunpack.c.l.b16 %v309
      %v523 = vunpack.c.h.b16 %v309
      %v524 = vunpack.c.l.b16 %v310
      %v525 = vunpack.c.h.b16 %v310
      %v526 = vunpack.c.l.b16 %v311
      %v527 = vunpack.c.h.b16 %v311
      %v528 = vunpack.c.l.b16 %v312
      %v529 = vunpack.c.h.b16 %v312
      %v530 = vunpack.c.l.b16 %v313
      %v531 = vunpack.c.h.b16 %v313
      %v532 = vunpack.c.l.b16 %v314
      %v533 = vunpack.c.h.b16 %v314
      %v534 = vunpack.c.l.b16 %v315
      %v535 = vunpack.c.h.b16 %v315
      %v536 = vunpack.c.l.b16 %v316
      %v537 = vunpack.c.h.b16 %v316
      %v538 = vunpack.c.l.b16 %v317
      %v539 = vunpack.c.h.b16 %v317
      %v540 = vunpack.c.l.b16 %v318
      %v541 = vunpack.c.h.b16 %v318
      %v542 = vunpack.c.l.b16 %v319
      %v543 = vunpack.c.h.b16 %v319
      %v544 = vunpack.c.l.b16 %v320
      %v545 = vunpack.c.h.b16 %v320
      %v546 = vunpack.c.l.b16 %v321
      %v547 = vunpack.c.h.b16 %v321
      %v548 = vunpack.c.l.b16 %v322
      %v549 = vunpack.c.h.b16 %v322
      %v550 = vunpack.c.l.b16 %v323
      %v551 = vunpack.c.h.b16 %v323
      %v552 = vunpack.c.l.b16 %v324
      %v553 = vunpack.c.h.b16 %v324
      %v554 = vunpack.c.l.b16 %v325
      %v555 = vunpack.c.h.b16 %v325
      %v556 = vunpack.c.l.b16 %v326
      %v557 = vunpack.c.h.b16 %v326
      %v558 = vunpack.c.l.b16 %v327
      %v559 = vunpack.c.h.b16 %v327
      %v560 = vunpack.c.l.b16 %v328
      %v561 = vunpack.c.h.b16 %v328
      %v562 = vunpack.c.l.b16 %v329
      %v563 = vunpack.c.h.b16 %v329
      %v564 = vunpack.c.l.b16 %v330
      %v565 = vunpack.c.h.b16 %v330
      %v566 = vunpack.c.l.b16 %v331
      %v567 = vunpack.c.h.b16 %v331
      %v568 = vunpack.c.l.b16 %v332
      %v569 = vunpack.c.h.b16 %v332
      %v570 = vunpack.c.l.b16 %v333
      %v571 = vunpack.c.h.b16 %v333
      %v572 = vunpack.c.l.b16 %v334
      %v573 = vunpack.c.h.b16 %v334
      %v574 = vunpack.c.l.b16 %v335
      %v575 = vunpack.c.h.b16 %v335
      %v576 = vunpack.c.l.b16 %v336
      %v577 = vunpack.c.h.b16 %v336
      %v578 = vunpack.c.l.b16 %v337
      %v579 = vunpack.c.h.b16 %v337
      %v580 = vunpack.c.l.b16 %v338
      %v581 = vunpack.c.h.b16 %v338
      %v582 = vunpack.c.l.b16 %v339
      %v583 = vunpack.c.h.b16 %v339
      %v584 = vunpack.c.l.b16 %v340
      %v585 = vunpack.c.h.b16 %v340
      %v586 = vunpack.c.l.b16 %v341
      %v587 = vunpack.c.h.b16 %v341
      %v588 = vunpack.c.l.b16 %v342
      %v589 = vunpack.c.h.b16 %v342
      %v590 = vunpack.c.l.b16 %v343
      %v591 = vunpack.c.h.b16 %v343
      %v592 = vunpack.c.l.b16 %v344
      %v593 = vunpack.c.h.b16 %v344
      %v594 = vunpack.c.l.b16 %v345
      %v595 = vunpack.c.h.b16 %v345
      %v596 = vunpack.c.l.b16 %v346
      %v597 = vunpack.c.h.b16 %v346
      %v598 = vunpack.c.l.b16 %v347
      %v599 = vunpack.c.h.b16 %v347
      %v600 = vunpack.c.l.b16 %v348
      %v601 = vunpack.c.h.b16 %v348
      %v602 = vunpack.c.l.b16 %v349
      %v603 = vunpack.c.h.b16 %v349
      %v604 = vunpack.c.l.b16 %v350
      %v605 = vunpack.c.h.b16 %v350
      %v606 = vunpack.c.l.b16 %v351
      %v607 = vunpack.c.h.b16 %v351
      %v608 = vunpack.c.l.b16 %v352
      %v609 = vunpack.c.h.b16 %v352
      %v610 = vunpack.c.l.b16 %v353
      %v611 = vunpack.c.h.b16 %v353
      %v612 = vunpack.c.l.b16 %v354
      %v613 = vunpack.c.h.b16 %v354
      %v614 = vunpack.c.l.b16 %v355
      %v615 = vunpack.c.h.b16 %v355
      %v616 = vunpack.c.l.b16 %v356
      %v617 = vunpack.c.h.b16 %v356
      %v618 = vunpack.c.l.b16 %v357
      %v619 = vunpack.c.h.b16 %v357
      %v620 = vunpack.c.l.b16 %v358
      %v621 = vunpack.c.h.b16 %v358
      %v622 = vunpack.c.l.b16 %v359
      %v623 = vunpack.c.h.b16 %v359
      %v624 = vunpack.c.l.b16 %v360
      %v625 = vunpack.c.h.b16 %v360
      %v626 = vunpack.c.l.b16 %v361
      %v627 = vunpack.c.h.b16 %v361
      %v628 = vunpack.c.l.b16 %v362
      %v629 = vunpack.c.h.b16 %v362
      %v630 = vunpack.c.l.b16 %v363
      %v631 = vunpack.c.h.b16 %v363
      %v632 = vunpack.c.l.b16 %v364
      %v633 = vunpack.c.h.b16 %v364
      %v634 = vunpack.c.l.b16 %v365
      %v635 = vunpack.c.h.b16 %v365
      %v636 = vunpack.c.l.b16 %v366
      %v637 = vunpack.c.h.b16 %v366
      %v638 = vunpack.c.l.b16 %v367
      %v639 = vunpack.c.h.b16 %v367
      %v640 = vunpack.c.l.b16 %v368
      %v641 = vunpack.c.h.b16 %v368
      %v642 = vunpack.c.l.b16 %v369
      %v643 = vunpack.c.h.b16 %v369
      %v644 = vunpack.c.l.b16 %v370
      %v645 = vunpack.c.h.b16 %v370
      %v646 = vunpack.c.l.b16 %v371
      %v647 = vunpack.c.h.b16 %v371
      %v648 = vunpack.c.l.b16 %v372
      %v649 = vunpack.c.h.b16 %v372
      %v650 = vunpack.c.l.b16 %v373
      %v651 = vunpack.c.h.b16 %v373
      %v652 = vunpack.c.l.b16 %v374
      %v653 = vunpack.c.h.b16 %v374
      %v654 = vunpack.c.l.b16 %v375
      %v655 = vunpack.c.h.b16 %v375
      %v656 = vunpack.c.l.b16 %v376
      %v657 = vunpack.c.h.b16 %v376
      %v658 = vunpack.c.l.b16 %v377
      %v659 = vunpack.c.h.b16 %v377
      %v660 = vunpack.c.l.b16 %v378
      %v661 = vunpack.c.h.b16 %v378
      %v662 = vunpack.c.l.b16 %v379
      %v663 = vunpack.c.h.b16 %v379
      %v664 = vunpack.c.l.b16 %v380
      %v665 = vunpack.c.h.b16 %v380
      %v666 = vunpack.c.l.b16 %v381
      %v667 = vunpack.c.h.b16 %v381
      %v668 = vunpack.c.l.b16 %v382
      %v669 = vunpack.c.h.b16 %v382
      %v670 = vunpack.c.l.b16 %v383
      %v671 = vunpack.c.h.b16 %v383
      %v672 = vunpack.c.l.b16 %v384
      %v673 = vunpack.c.h.b16 %v384
      %v674 = vunpack.c.l.b16 %v385
      %v675 = vunpack.c.h.b16 %v385
      %v676 = vunpack.c.l.b16 %v386
      %v677 = vunpack.c.h.b16 %v386
      %v678 = vunpack.c.l.b16 %v387
      %v679 = vunpack.c.h.b16 %v387
      %v680 = vunpack.c.l.b16 %v388
      %v681 = vunpack.c.h.b16 %v388
      %v682 = vunpack.c.l.b16 %v389
      %v683 = vunpack.c.h.b16 %v389
      %v684 = vpack.c.b16 %v494, %v492
      %v685 = vpack.c.b16 %v495, %v493
      %v686 = vpack.c.b16 %v498, %v496
      %v687 = vpack.c.b16 %v499, %v497
      %v688 = vpack.c.b16 %v502, %v500
      %v689 = vpack.c.b16 %v503, %v501
      %v690 = vpack.c.b16 %v506, %v504
      %v691 = vpack.c.b16 %v507, %v505
      %v692 = vpack.c.b16 %v510, %v508
      %v693 = vpack.c.b16 %v511, %v509
      %v694 = vpack.c.b16 %v514, %v512
      %v695 = vpack.c.b16 %v515, %v513
      %v696 = vpack.c.b16 %v518, %v516
      %v697 = vpack.c.b16 %v519, %v517
      %v698 = vpack.c.b16 %v522, %v520
      %v699 = vpack.c.b16 %v523, %v521
      %v700 = vpack.c.b16 %v526, %v524
      %v701 = vpack.c.b16 %v527, %v525
      %v702 = vpack.c.b16 %v530, %v528
      %v703 = vpack.c.b16 %v531, %v529
      %v704 = vpack.c.b16 %v534, %v532
      %v705 = vpack.c.b16 %v535, %v533
      %v706 = vpack.c.b16 %v538, %v536
      %v707 = vpack.c.b16 %v539, %v537
      %v708 = vpack.c.b16 %v542, %v540
      %v709 = vpack.c.b16 %v543, %v541
      %v710 = vpack.c.b16 %v546, %v544
      %v711 = vpack.c.b16 %v547, %v545
      %v712 = vpack.c.b16 %v550, %v548
      %v713 = vpack.c.b16 %v551, %v549
      %v714 = vpack.c.b16 %v554, %v552
      %v715 = vpack.c.b16 %v555, %v553
      %v716 = vpack.c.b16 %v558, %v556
      %v717 = vpack.c.b16 %v559, %v557
      %v718 = vpack.c.b16 %v562, %v560
      %v719 = vpack.c.b16 %v563, %v561
      %v720 = vpack.c.b16 %v566, %v564
      %v721 = vpack.c.b16 %v567, %v565
      %v722 = vpack.c.b16 %v570, %v568
      %v723 = vpack.c.b16 %v571, %v569
      %v724 = vpack.c.b16 %v574, %v572
      %v725 = vpack.c.b16 %v575, %v573
      %v726 = vpack.c.b16 %v578, %v576
      %v727 = vpack.c.b16 %v579, %v577
      %v728 = vpack.c.b16 %v582, %v580
      %v729 = vpack.c.b16 %v583, %v581
      %v730 = vpack.c.b16 %v586, %v584
      %v731 = vpack.c.b16 %v587, %v585
      %v732 = vpack.c.b16 %v590, %v588
      %v733 = vpack.c.b16 %v591, %v589
      %v734 = vpack.c.b16 %v594, %v592
      %v735 = vpack.c.b16 %v595, %v593
      %v736 = vpack.c.b16 %v598, %v596
      %v737 = vpack.c.b16 %v599, %v597
      %v738 = vpack.c.b16 %v602, %v600
      %v739 = vpack.c.b16 %v603, %v601
      %v740 = vpack.c.b16 %v606, %v604
      %v741 = vpack.c.b16 %v607, %v605
      %v742 = vpack.c.b16 %v610, %v608
      %v743 = vpack.c.b16 %v611, %v609
      %v744 = vpack.c.b16 %v614, %v612
      %v745 = vpack.c.b16 %v615, %v613
      %v746 = vpack.c.b16 %v618, %v616
      %v747 = vpack.c.b16 %v619, %v617
      %v748 = vpack.c.b16 %v622, %v620
      %v749 = vpack.c.b16 %v623, %v621
      %v750 = vpack.c.b16 %v626, %v624
      %v751 = vpack.c.b16 %v627, %v625
      %v752 = vpack.c.b16 %v630, %v628
      %v753 = vpack.c.b16 %v631, %v629
      %v754 = vpack.c.b16 %v634, %v632
      %v755 = vpack.c.b16 %v635, %v633
      %v756 = vpack.c.b16 %v638, %v636
      %v757 = vpack.c.b16 %v639, %v637
      %v758 = vpack.c.b16 %v642, %v640
      %v759 = vpack.c.b16 %v643, %v641
      %v760 = vpack.c.b16 %v646, %v644
      %v761 = vpack.c.b16 %v647, %v645
      %v762 = vpack.c.b16 %v650, %v648
      %v763 = vpack.c.b16 %v651, %v649
      %v764 = vpack.c.b16 %v654, %v652
      %v765 = vpack.c.b16 %v655, %v653
      %v766 = vpack.c.b16 %v658, %v656
      %v767 = vpack.c.b16 %v659, %v657
      %v768 = vpack.c.b16 %v662, %v660
      %v769 = vpack.c.b16 %v663, %v661
      %v770 = vpack.c.b16 %v666, %v664
      %v771 = vpack.c.b16 %v667, %v665
      %v772 = vpack.c.b16 %v670, %v668
      %v773 = vpack.c.b16 %v671, %v669
      %v774 = vpack.c.b16 %v674, %v672
      %v775 = vpack.c.b16 %v675, %v673
      %v776 = vpack.c.b16 %v678, %v676
      %v777 = vpack.c.b16 %v679, %v677
      %v778 = vpack.c.b16 %v682, %v680
      %v779 = vpack.c.b16 %v683, %v681
      %876 = vmatpush.bf16.msra.mxu0 %v698
      %877 = vmatpush.bf16.msra.mxu0 %v696
      %878 = vmatpush.bf16.msra.mxu0 %v694
      %879 = vmatpush.bf16.msra.mxu0 %v692
      %880 = vmatpush.bf16.msra.mxu0 %v690
      %881 = vmatpush.bf16.msra.mxu0 %v688
      %882 = vmatpush.bf16.msra.mxu0 %v686
      %883 = vmatpush.bf16.msra.mxu0 %v684
      %884 = vmatmul.bf16.gmra.mxu0 %v288
      %v885 = vpop.f32.mrf.mxu0
      %v886 = vadd.f32 %v392, %v885
      %v887 = vpop.f32.mrf.mxu0
      %v888 = vadd.f32 %v392, %v887
      %889 = vdwg.mxu0
      %890 = vmatpush.bf16.msra.mxu0 %v714
      %891 = vmatpush.bf16.msra.mxu0 %v712
      %892 = vmatpush.bf16.msra.mxu0 %v710
      %893 = vmatpush.bf16.msra.mxu0 %v708
      %894 = vmatpush.bf16.msra.mxu0 %v706
      %895 = vmatpush.bf16.msra.mxu0 %v704
      %896 = vmatpush.bf16.msra.mxu0 %v702
      %897 = vmatpush.bf16.msra.mxu0 %v700
      %898 = vmatmul.bf16.gmra.mxu0 %v289
      %v899 = vpop.f32.mrf.mxu0
      %v900 = vadd.f32 %v886, %v899
      %v901 = vpop.f32.mrf.mxu0
      %v902 = vadd.f32 %v888, %v901
      %903 = vdwg.mxu0
      %904 = vmatpush.bf16.msra.mxu0 %v730
      %905 = vmatpush.bf16.msra.mxu0 %v728
      %906 = vmatpush.bf16.msra.mxu0 %v726
      %907 = vmatpush.bf16.msra.mxu0 %v724
      %908 = vmatpush.bf16.msra.mxu0 %v722
      %909 = vmatpush.bf16.msra.mxu0 %v720
      %910 = vmatpush.bf16.msra.mxu0 %v718
      %911 = vmatpush.bf16.msra.mxu0 %v716
      %912 = vmatmul.bf16.gmra.mxu0 %v290
      %v913 = vpop.f32.mrf.mxu0
      %v914 = vadd.f32 %v900, %v913
      %v915 = vpop.f32.mrf.mxu0
      %v916 = vadd.f32 %v902, %v915
      %917 = vdwg.mxu0
      %918 = vmatpush.bf16.msra.mxu0 %v746
      %919 = vmatpush.bf16.msra.mxu0 %v744
      %920 = vmatpush.bf16.msra.mxu0 %v742
      %921 = vmatpush.bf16.msra.mxu0 %v740
      %922 = vmatpush.bf16.msra.mxu0 %v738
      %923 = vmatpush.bf16.msra.mxu0 %v736
      %924 = vmatpush.bf16.msra.mxu0 %v734
      %925 = vmatpush.bf16.msra.mxu0 %v732
      %926 = vmatmul.bf16.gmra.mxu0 %v291
      %v927 = vpop.f32.mrf.mxu0
      %v928 = vadd.f32 %v914, %v927
      %v929 = vpop.f32.mrf.mxu0
      %v930 = vadd.f32 %v916, %v929
      %931 = vdwg.mxu0
      %932 = vmatpush.bf16.msra.mxu0 %v762
      %933 = vmatpush.bf16.msra.mxu0 %v760
      %934 = vmatpush.bf16.msra.mxu0 %v758
      %935 = vmatpush.bf16.msra.mxu0 %v756
      %936 = vmatpush.bf16.msra.mxu0 %v754
      %937 = vmatpush.bf16.msra.mxu0 %v752
      %938 = vmatpush.bf16.msra.mxu0 %v750
      %939 = vmatpush.bf16.msra.mxu0 %v748
      %940 = vmatmul.bf16.gmra.mxu0 %v292
      %v941 = vpop.f32.mrf.mxu0
      %v942 = vadd.f32 %v928, %v941
      %v943 = vpop.f32.mrf.mxu0
      %v944 = vadd.f32 %v930, %v943
      %945 = vdwg.mxu0
      %946 = vmatpush.bf16.msra.mxu0 %v778
      %947 = vmatpush.bf16.msra.mxu0 %v776
      %948 = vmatpush.bf16.msra.mxu0 %v774
      %949 = vmatpush.bf16.msra.mxu0 %v772
      %950 = vmatpush.bf16.msra.mxu0 %v770
      %951 = vmatpush.bf16.msra.mxu0 %v768
      %952 = vmatpush.bf16.msra.mxu0 %v766
      %953 = vmatpush.bf16.msra.mxu0 %v764
      %954 = vmatmul.bf16.gmra.mxu0 %v293
      %v955 = vpop.f32.mrf.mxu0
      %v956 = vadd.f32 %v942, %v955
      %v957 = vpop.f32.mrf.mxu0
      %v958 = vadd.f32 %v944, %v957
      %959 = vdwg.mxu0
      %960 = vmatpush.bf16.msra.mxu0 %v699
      %961 = vmatpush.bf16.msra.mxu0 %v697
      %962 = vmatpush.bf16.msra.mxu0 %v695
      %963 = vmatpush.bf16.msra.mxu0 %v693
      %964 = vmatpush.bf16.msra.mxu0 %v691
      %965 = vmatpush.bf16.msra.mxu0 %v689
      %966 = vmatpush.bf16.msra.mxu0 %v687
      %967 = vmatpush.bf16.msra.mxu0 %v685
      %968 = vmatmul.bf16.gmra.mxu0 %v288
      %v969 = vpop.f32.mrf.mxu0
      %v970 = vadd.f32 %v393, %v969
      %v971 = vpop.f32.mrf.mxu0
      %v972 = vadd.f32 %v393, %v971
      %973 = vdwg.mxu0
      %974 = vmatpush.bf16.msra.mxu0 %v715
      %975 = vmatpush.bf16.msra.mxu0 %v713
      %976 = vmatpush.bf16.msra.mxu0 %v711
      %977 = vmatpush.bf16.msra.mxu0 %v709
      %978 = vmatpush.bf16.msra.mxu0 %v707
      %979 = vmatpush.bf16.msra.mxu0 %v705
      %980 = vmatpush.bf16.msra.mxu0 %v703
      %981 = vmatpush.bf16.msra.mxu0 %v701
      %982 = vmatmul.bf16.gmra.mxu0 %v289
      %v983 = vpop.f32.mrf.mxu0
      %v984 = vadd.f32 %v970, %v983
      %v985 = vpop.f32.mrf.mxu0
      %v986 = vadd.f32 %v972, %v985
      %987 = vdwg.mxu0
      %988 = vmatpush.bf16.msra.mxu0 %v731
      %989 = vmatpush.bf16.msra.mxu0 %v729
      %990 = vmatpush.bf16.msra.mxu0 %v727
      %991 = vmatpush.bf16.msra.mxu0 %v725
      %992 = vmatpush.bf16.msra.mxu0 %v723
      %993 = vmatpush.bf16.msra.mxu0 %v721
      %994 = vmatpush.bf16.msra.mxu0 %v719
      %995 = vmatpush.bf16.msra.mxu0 %v717
      %996 = vmatmul.bf16.gmra.mxu0 %v290
      %v997 = vpop.f32.mrf.mxu0
      %v998 = vadd.f32 %v984, %v997
      %v999 = vpop.f32.mrf.mxu0
      %v1000 = vadd.f32 %v986, %v999
      %1001 = vdwg.mxu0
      %1002 = vmatpush.bf16.msra.mxu0 %v747
      %1003 = vmatpush.bf16.msra.mxu0 %v745
      %1004 = vmatpush.bf16.msra.mxu0 %v743
      %1005 = vmatpush.bf16.msra.mxu0 %v741
      %1006 = vmatpush.bf16.msra.mxu0 %v739
      %1007 = vmatpush.bf16.msra.mxu0 %v737
      %1008 = vmatpush.bf16.msra.mxu0 %v735
      %1009 = vmatpush.bf16.msra.mxu0 %v733
      %1010 = vmatmul.bf16.gmra.mxu0 %v291
      %v1011 = vpop.f32.mrf.mxu0
      %v1012 = vadd.f32 %v998, %v1011
      %v1013 = vpop.f32.mrf.mxu0
      %v1014 = vadd.f32 %v1000, %v1013
      %1015 = vdwg.mxu0
      %1016 = vmatpush.bf16.msra.mxu0 %v763
      %1017 = vmatpush.bf16.msra.mxu0 %v761
      %1018 = vmatpush.bf16.msra.mxu0 %v759
      %1019 = vmatpush.bf16.msra.mxu0 %v757
      %1020 = vmatpush.bf16.msra.mxu0 %v755
      %1021 = vmatpush.bf16.msra.mxu0 %v753
      %1022 = vmatpush.bf16.msra.mxu0 %v751
      %1023 = vmatpush.bf16.msra.mxu0 %v749
      %1024 = vmatmul.bf16.gmra.mxu0 %v292
      %v1025 = vpop.f32.mrf.mxu0
      %v1026 = vadd.f32 %v1012, %v1025
      %v1027 = vpop.f32.mrf.mxu0
      %v1028 = vadd.f32 %v1014, %v1027
      %1029 = vdwg.mxu0
      %1030 = vmatpush.bf16.msra.mxu0 %v779
      %1031 = vmatpush.bf16.msra.mxu0 %v777
      %1032 = vmatpush.bf16.msra.mxu0 %v775
      %1033 = vmatpush.bf16.msra.mxu0 %v773
      %1034 = vmatpush.bf16.msra.mxu0 %v771
      %1035 = vmatpush.bf16.msra.mxu0 %v769
      %1036 = vmatpush.bf16.msra.mxu0 %v767
      %1037 = vmatpush.bf16.msra.mxu0 %v765
      %1038 = vmatmul.bf16.gmra.mxu0 %v293
      %v1039 = vpop.f32.mrf.mxu0
      %v1040 = vadd.f32 %v1026, %v1039
      %v1041 = vpop.f32.mrf.mxu0
      %v1042 = vadd.f32 %v1028, %v1041
      %1043 = vdwg.mxu0
      %v1044 = vld [vmem:[%s265] sm:$0xff]
      %v1045 = vld [vmem:[%s265 + $0x8] sm:$0xff]
      %v1046 = vunpack.c.l.bf16 %v1044
      %v1047 = vunpack.c.h.bf16 %v1044
      %v1048 = vunpack.c.l.bf16 %v1045
      %v1049 = vunpack.c.h.bf16 %v1045
      %v1050 = vmul.f32 %v956, %v1046
      %v1051 = vmul.f32 %v1040, %v1047
      %v1052 = vmul.f32 %v958, %v1048
      %v1053 = vmul.f32 %v1042, %v1049
      %vm1054 = vcmask 588800
      %v1055 = vsel %vm1054, %v1051, 0.0
      %v1056 = vadd.f32 %v1050, %v1055
      %1057 = vadd.xlane.f32.xlu0 %v1056
      %v1058 = vpop.xlane.xlu0 %1057
      %v1059 = vsel %vm1054, %v1053, 0.0
      %v1060 = vadd.f32 %v1052, %v1059
      %1061 = vadd.xlane.f32.xlu0 %v1060
      %v1062 = vpop.xlane.xlu0 %1061
      %v1063 = vmul.f32 %v956, %v956
      %v1064 = vmul.f32 %v1040, %v1040
      %v1065 = vmul.f32 %v958, %v958
      %v1066 = vmul.f32 %v1042, %v1042
      %v1067 = vsel %vm1054, %v1064, 0.0
      %v1068 = vadd.f32 %v1063, %v1067
      %1069 = vadd.xlane.f32.xlu0 %v1068
      %v1070 = vpop.xlane.xlu0 %1069
      %v1071 = vsel %vm1054, %v1066, 0.0
      %v1072 = vadd.f32 %v1065, %v1071
      %1073 = vadd.xlane.f32.xlu0 %v1072
      %v1074 = vpop.xlane.xlu0 %1073
      %v1075 = vmul.f32 %v1046, %v1046
      %v1076 = vmul.f32 %v1047, %v1047
      %v1077 = vmul.f32 %v1048, %v1048
      %v1078 = vmul.f32 %v1049, %v1049
      %v1079 = vsel %vm1054, %v1076, 0.0
      %v1080 = vadd.f32 %v1075, %v1079
      %1081 = vadd.xlane.f32.xlu0 %v1080
      %v1082 = vpop.xlane.xlu0 %1081
      %v1083 = vsel %vm1054, %v1078, 0.0
      %v1084 = vadd.f32 %v1077, %v1083
      %1085 = vadd.xlane.f32.xlu0 %v1084
      %v1086 = vpop.xlane.xlu0 %1085
      %v1087 = vmul.f32 %v1070, %v1082
      %v1088 = vmul.f32 %v1074, %v1086
      %v1089 = vmax.f32 %v1087, 1e-16
      %v1090 = vmax.f32 %v1088, 1e-16
      %v1091 = vrsqrt.pop %v1089
      %v1092 = vmul.f32 %v1091, %v1089
      %v1093 = vmul.f32 %v1092, %v1091
      %v1094 = vmul.f32 0.5, %v1093
      %v1095 = vsub.f32 1.5, %v1094
      %v1096 = vmul.f32 %v1091, %v1095
      %vm1097 = vweird.f32 %v1089
      %vm1098 = vweird.f32 %v1091
      %vm1099 = vmor %vm1097, %vm1098
      %v1100 = vsel %vm1099, %v1091, %v1096
      %v1101 = vrsqrt.pop %v1090
      %v1102 = vmul.f32 %v1101, %v1090
      %v1103 = vmul.f32 %v1102, %v1101
      %v1104 = vmul.f32 0.5, %v1103
      %v1105 = vsub.f32 1.5, %v1104
      %v1106 = vmul.f32 %v1101, %v1105
      %vm1107 = vweird.f32 %v1090
      %vm1108 = vweird.f32 %v1101
      %vm1109 = vmor %vm1107, %vm1108
      %v1110 = vsel %vm1109, %v1101, %v1106
      %v1111 = vmul.f32 %v1058, %v1100
      %v1112 = vmul.f32 %v1062, %v1110
      %s1113 = smul.u32 %s15, 16
      %v1114 = vlaneseq
      %v1115 = vshrl.u32 %v1114, 7
      %v1116 = vadd.s32 %v1115, 8
      %v1117 = vstv %s1113
      %v1118 = vadd.s32 %v1117, %v1115
      %v1119 = vadd.s32 %v1117, %v1116
      %vm1120 = vcmp.lt.s32.totalorder %v1118, 40
      %vm1121 = vcmp.lt.s32.totalorder %v1119, 40
      %v1122 = vsel %vm1120, %v1111, 0.0
      %v1123 = vsel %vm1121, %v1112, 0.0
      %vm1124 = vcmask 7168
      %v1125 = vsel %vm1124, %v1122, 0.0
      %v1126 = vsel %vm1124, %v1123, 0.0
      %v1127 = vadd.f32 %v1125, %v1126
      %1128 = vadd.xlane.f32.xlu0 %v1127
      %v1129 = vpop.xlane.xlu0 %1128
      %v1130 = vrot.slane %v1129, 4
      %v1131 = vadd.f32 %v1129, %v1130
      %v1132 = vrot.slane %v1131, 2
      %v1133 = vadd.f32 %v1131, %v1132
      %v1134 = vrot.slane %v1133, 1
      %v1135 = vadd.f32 %v1133, %v1134
      %s1136 = vtos %v1135
      %v1137 = vstv %s1136
      %1138 = vst [vmem:[%s275] sm:$0xff] %v1137
      %p1139 = scmp.lt.s32.totalorder %s15, 2
      %s1140 = scalar_select %p1139, %s15, 2
      %s1141 = smul.addr %s1140, 8
      %s1142 = scalar_lea.vmem %s4, %s1141
      // Predicated region
      $region37: #{relation_extractor_loss.1} parent=35 // pred_check
        %p1143 = pneg %p127
      $region38: #{relation_extractor_loss.1} parent=35 // pred_check_branch
        %1145 = sbr.rel (%p1143) target = $region40
      $region39: #{relation_extractor_loss.1} parent=35 // pred_region
        _
      $region40: #{relation_extractor_loss.1} parent=35 // pred_fallthru
        _
    $region36: #{relation_extractor_loss.1} parent=5 // pred_fallthru
      _
    %p1146 = scmp.le.s32.totalorder 2, %s10
    // Predicated region
    $region41: #{relation_extractor_loss.1} parent=5 // pred_check
      %p1147 = pneg %p1146
    $region42: #{relation_extractor_loss.1} parent=5 // pred_check_branch
      %1149 = sbr.rel (%p1147) target = $region44
    $region43: #{relation_extractor_loss.1} parent=5 // pred_region
      %s1150 = ssub.s32 %s10, 2
      // Predicated region
      $region45: #{relation_extractor_loss.1} parent=43 // pred_check
        %p1151 = pneg %p133
      $region46: #{relation_extractor_loss.1} parent=43 // pred_check_branch
        %1153 = sbr.rel (%p1151) target = $region48
      $region47: #{relation_extractor_loss.1} parent=43 // pred_region
        %p1154 = scmp.lt.s32.totalorder %s16, 2
        %s1155 = scalar_select %p1154, %s16, 2
        %s1156 = smul.addr %s1155, 8
        %s1157 = scalar_lea.vmem %s4, %s1156
      $region48: #{relation_extractor_loss.1} parent=43 // pred_fallthru
        _
    $region44: #{relation_extractor_loss.1} parent=5 // pred_fallthru
      _
  $region6: #{relation_extractor_loss.1} parent=0 // loop_footer
    %s14 = sadd.s32 1, %s10
  $region7: #{relation_extractor_loss.1} parent=0 // loop_footer_branch
    %9 = sbr.rel target = $region3
  $region8: #{relation_extractor_loss.1} parent=0 // loop_exit
    _

</llo_original>
